<compile_context>
chip_gen: v5e
topology: v5e:2x2
jax: 0.10.0
libtpu: 0.0.40
codegen_flags: <defaults>
</compile_context>

<pallas_src>
import jax
import jax.numpy as jnp
from jax.experimental import pallas as pl
from jax.experimental.pallas import tpu as pltpu


def _round_up(x: int, m: int) -> int:
    return ((x + m - 1) // m) * m


def actor_critic_kernel(obs_ref, wh_ref, bh_ref, whead_ref, bhead_ref, out_ref):
    # HiddenNet: Linear + ReLU
    h = jnp.dot(obs_ref[...], wh_ref[...],
                preferred_element_type=jnp.float32) + bh_ref[...]
    h = jnp.maximum(h, 0.0)
    # Fused heads: [mu (A) | value (1) | zero pad]
    out_ref[...] = jnp.dot(h, whead_ref[...],
                           preferred_element_type=jnp.float32) + bhead_ref[...]


def actor_critic_forward(obs, params, *, tile_batch: int = 512):
    """Pallas-fused forward pass.

    Returns (dist, value, rnd_value, hidden_out, task_predict) mirroring the
    PyTorch module. dist is represented by its (mean, std) parameters.
    """
    B, obs_dim = obs.shape
    H = params["w_h"].shape[1]
    A = params["w_mu"].shape[1]

    n_head = A + 1                         # mu | value
    n_pad = _round_up(n_head, 128)         # lane-dense output width

    # Pack the two heads into one (H, n_pad) weight / (1, n_pad) bias.
    w_head = jnp.zeros((H, n_pad), jnp.float32)
    w_head = w_head.at[:, :A].set(params["w_mu"])
    w_head = w_head.at[:, A:A + 1].set(params["w_v"])
    b_head = jnp.zeros((1, n_pad), jnp.float32)
    b_head = b_head.at[:, :A].set(params["b_mu"])
    b_head = b_head.at[:, A:A + 1].set(params["b_v"])

    # Batch tiling: TB multiple of 8 sublanes, <= tile_batch rows, and chosen
    # so the parallel grid axis has >= 2 steps whenever B >= 16 (v7x has 2 TCs).
    half = _round_up(max(1, (B + 1) // 2), 8)
    TB = max(8, min(tile_batch, half))
    grid = (pl.cdiv(B, TB),)

    # Per-tile VMEM budget: double-buffered obs + out, hidden intermediate,
    # (default double-buffered) resident weights. Clamp: >= 32 MiB so v5e's
    # 16 MiB default scoped limit never bites, <= 48 MiB to respect v7x's
    # 64 MiB physical VMEM.
    vmem_need = 4 * (2 * TB * obs_dim + 2 * TB * n_pad + TB * H
                     + 2 * (obs_dim * H + H) + 2 * (H * n_pad + n_pad))
    vmem_limit = int(min(48 << 20, max(2 * vmem_need, 32 << 20)))

    flops = 2 * B * (obs_dim * H + H * n_pad)
    bytes_accessed = 4 * (obs.size + params["w_h"].size + params["b_h"].size
                          + w_head.size + b_head.size + B * n_pad)

    out = pl.pallas_call(
        actor_critic_kernel,
        out_shape=jax.ShapeDtypeStruct((B, n_pad), jnp.float32),
        grid=grid,
        in_specs=[
            pl.BlockSpec((TB, obs_dim), lambda i: (i, 0)),    # obs: streamed
            pl.BlockSpec((obs_dim, H), lambda i: (0, 0)),     # weights: resident
            pl.BlockSpec((1, H), lambda i: (0, 0)),
            pl.BlockSpec((H, n_pad), lambda i: (0, 0)),
            pl.BlockSpec((1, n_pad), lambda i: (0, 0)),
        ],
        out_specs=pl.BlockSpec((TB, n_pad), lambda i: (i, 0)),
        compiler_params=pltpu.CompilerParams(
            dimension_semantics=("parallel",),
            vmem_limit_bytes=vmem_limit),
        cost_estimate=pl.CostEstimate(
            flops=flops,
            transcendentals=0,
            bytes_accessed=bytes_accessed),
    )(obs, params["w_h"], params["b_h"], w_head, b_head)

    mu = out[:, :A]
    value = out[:, A:A + 1]
    # std is batch-independent: one tiny exp outside the kernel, lazy broadcast.
    std = jnp.broadcast_to(jnp.exp(params["log_std"]), (B, A))

    dist = (mu, std)
    rnd_value = None      # use_rnd = False
    hidden_out = None     # use_lstm = False
    task_predict = None   # multi_task = False
    return dist, value, rnd_value, hidden_out, task_predict


def init_params(key, obs_dim, hidden_size, action_dim):
    ks = jax.random.split(key, 4)
    scale_h = 1.0 / jnp.sqrt(obs_dim)
    scale_o = 1.0 / jnp.sqrt(hidden_size)
    return {
        "w_h":  jax.random.normal(ks[0], (obs_dim, hidden_size), jnp.float32) * scale_h,
        "b_h":  jnp.zeros((1, hidden_size), jnp.float32),
        "w_mu": jax.random.normal(ks[1], (hidden_size, action_dim), jnp.float32) * scale_o,
        "b_mu": jnp.zeros((1, action_dim), jnp.float32),
        "w_v":  jax.random.normal(ks[2], (hidden_size, 1), jnp.float32) * scale_o,
        "b_v":  jnp.zeros((1, 1), jnp.float32),
        "log_std": jnp.zeros((action_dim,), jnp.float32),
    }


def _reference_forward(obs, params):
    h = jnp.maximum(obs @ params["w_h"] + params["b_h"], 0.0)
    mu = h @ params["w_mu"] + params["b_mu"]
    value = h @ params["w_v"] + params["b_v"]
    std = jnp.broadcast_to(jnp.exp(params["log_std"]), mu.shape)
    return mu, std, value


if __name__ == "__main__":
    # Small shapes consistent with the vector-obs branch.
    B, OBS_DIM, HIDDEN, ACTION_DIM = 8, 32, 32, 8

    key = jax.random.PRNGKey(0)
    k_obs, k_par = jax.random.split(key)
    obs = jax.random.normal(k_obs, (B, OBS_DIM), jnp.float32)
    params = init_params(k_par, OBS_DIM, HIDDEN, ACTION_DIM)

    dist, value, rnd_value, hidden_out, task_predict = actor_critic_forward(obs, params)
    (mu, std) = dist
    jax.block_until_ready(mu)
    jax.block_until_ready(std)
    jax.block_until_ready(value)

    assert mu.shape == (B, ACTION_DIM)
    assert std.shape == (B, ACTION_DIM)
    assert value.shape == (B, 1)
    assert rnd_value is None and hidden_out is None and task_predict is None

    # Correctness vs. plain-JAX reference of the same branch.
    mu_ref, std_ref, value_ref = _reference_forward(obs, params)
    assert jnp.allclose(mu, mu_ref, atol=1e-5, rtol=1e-5)
    assert jnp.allclose(std, std_ref, atol=1e-5, rtol=1e-5)
    assert jnp.allclose(value, value_ref, atol=1e-5, rtol=1e-5)

    print("KERNEL_OK")
</pallas_src>

<mosaic_0001>
module attributes {stable_mosaic.version = 11 : i64} {
  func.func @actor_critic_kernel(%arg0: i32, %arg1: memref<8x32xf32, #tpu.memory_space<vmem>>, %arg2: memref<32x32xf32, #tpu.memory_space<vmem>>, %arg3: memref<1x32xf32, #tpu.memory_space<vmem>>, %arg4: memref<32x128xf32, #tpu.memory_space<vmem>>, %arg5: memref<1x128xf32, #tpu.memory_space<vmem>>, %arg6: memref<8x128xf32, #tpu.memory_space<vmem>>) attributes {dimension_semantics = [#tpu.dimension_semantics<parallel>], iteration_bounds = array<i64: 1>, scalar_prefetch = 0 : i64, scratch_operands = 0 : i64, tpu.core_type = #tpu.core_type<tc>, window_params = [{transform_indices = @transform_0, window_bounds = array<i64: 8, 32>}, {pipeline_mode = #tpu.pipeline_mode<synchronous>, transform_indices = @transform_1, window_bounds = array<i64: 32, 32>}, {pipeline_mode = #tpu.pipeline_mode<synchronous>, transform_indices = @transform_2, window_bounds = array<i64: 1, 32>}, {pipeline_mode = #tpu.pipeline_mode<synchronous>, transform_indices = @transform_3, window_bounds = array<i64: 32, 128>}, {pipeline_mode = #tpu.pipeline_mode<synchronous>, transform_indices = @transform_4, window_bounds = array<i64: 1, 128>}, {transform_indices = @transform_5, window_bounds = array<i64: 8, 128>}]} {
    %c0 = arith.constant 0 : index
    %c0_0 = arith.constant 0 : index
    %0 = vector.load %arg1[%c0, %c0_0] : memref<8x32xf32, #tpu.memory_space<vmem>>, vector<8x32xf32>
    %c0_1 = arith.constant 0 : index
    %c0_2 = arith.constant 0 : index
    %1 = vector.load %arg2[%c0_1, %c0_2] : memref<32x32xf32, #tpu.memory_space<vmem>>, vector<32x32xf32>
    %cst = arith.constant dense<0.000000e+00> : vector<8x32xf32>
    %2 = tpu.matmul %0, %1, %cst {dimension_numbers = #tpu.dot_dimension_numbers<[1], [0], [0], [1], [0, 0, 1, 1], [], []>} : vector<8x32xf32>, vector<32x32xf32>, vector<8x32xf32> -> vector<8x32xf32>
    %c0_3 = arith.constant 0 : index
    %c0_4 = arith.constant 0 : index
    %3 = vector.load %arg3[%c0_3, %c0_4] : memref<1x32xf32, #tpu.memory_space<vmem>>, vector<1x32xf32>
    %4 = vector.broadcast %3 : vector<1x32xf32> to vector<8x32xf32>
    %5 = arith.addf %2, %4 : vector<8x32xf32>
    %cst_5 = arith.constant 0.000000e+00 : f32
    %6 = vector.broadcast %cst_5 : f32 to vector<8x32xf32>
    %7 = arith.maximumf %5, %6 : vector<8x32xf32>
    %c0_6 = arith.constant 0 : index
    %c0_7 = arith.constant 0 : index
    %8 = vector.load %arg4[%c0_6, %c0_7] : memref<32x128xf32, #tpu.memory_space<vmem>>, vector<32x128xf32>
    %cst_8 = arith.constant dense<0.000000e+00> : vector<8x128xf32>
    %9 = tpu.matmul %7, %8, %cst_8 {dimension_numbers = #tpu.dot_dimension_numbers<[1], [0], [0], [1], [0, 0, 1, 1], [], []>} : vector<8x32xf32>, vector<32x128xf32>, vector<8x128xf32> -> vector<8x128xf32>
    %c0_9 = arith.constant 0 : index
    %c0_10 = arith.constant 0 : index
    %10 = vector.load %arg5[%c0_9, %c0_10] : memref<1x128xf32, #tpu.memory_space<vmem>>, vector<1x128xf32>
    %11 = vector.broadcast %10 : vector<1x128xf32> to vector<8x128xf32>
    %12 = arith.addf %9, %11 : vector<8x128xf32>
    %c0_11 = arith.constant 0 : index
    %c0_12 = arith.constant 0 : index
    %13 = vector.load %arg6[%c0_11, %c0_12] : memref<8x128xf32, #tpu.memory_space<vmem>>, vector<8x128xf32>
    tpu.vector_store %arg6[%c0_11, %c0_12], %12 {strides = array<i32>} : memref<8x128xf32, #tpu.memory_space<vmem>>, vector<8x128xf32>,
    return
  }
  func.func @transform_0(%arg0: i32) -> (i32, i32) {
    %c0_i32 = arith.constant 0 : i32
    %c0_i32_0 = arith.constant 0 : i32
    return %arg0, %c0_i32 : i32, i32
  }
  func.func @transform_1(%arg0: i32) -> (i32, i32) {
    %c0_i32 = arith.constant 0 : i32
    %c0_i32_0 = arith.constant 0 : i32
    %c0_i32_1 = arith.constant 0 : i32
    return %c0_i32, %c0_i32_0 : i32, i32
  }
  func.func @transform_2(%arg0: i32) -> (i32, i32) {
    %c0_i32 = arith.constant 0 : i32
    %c0_i32_0 = arith.constant 0 : i32
    %c0_i32_1 = arith.constant 0 : i32
    return %c0_i32, %c0_i32_0 : i32, i32
  }
  func.func @transform_3(%arg0: i32) -> (i32, i32) {
    %c0_i32 = arith.constant 0 : i32
    %c0_i32_0 = arith.constant 0 : i32
    %c0_i32_1 = arith.constant 0 : i32
    return %c0_i32, %c0_i32_0 : i32, i32
  }
  func.func @transform_4(%arg0: i32) -> (i32, i32) {
    %c0_i32 = arith.constant 0 : i32
    %c0_i32_0 = arith.constant 0 : i32
    %c0_i32_1 = arith.constant 0 : i32
    return %c0_i32, %c0_i32_0 : i32, i32
  }
  func.func @transform_5(%arg0: i32) -> (i32, i32) {
    %c0_i32 = arith.constant 0 : i32
    %c0_i32_0 = arith.constant 0 : i32
    return %arg0, %c0_i32 : i32, i32
  }
}

</mosaic_0001>

<llo_original>
// kernel: tpu_custom_call.1
$region0: #{tpu_custom_call.1}
  #allocation0 [shape = 'u32[]', space=smem, size = 0x4, offset = 0x4, fixed_abs, tag = 'smem constant byte address 0x4 - core index']
  #allocation1 [shape = 'u32[72,128]{1,0:T(1,128)}', space=vmem, size = 0x9000, scoped, tag = 'internal scratch']
  %s0 = inlined_call_operand.hbm [shape: f32[8,32], index: 0, kind: input, shape index: {}]
  %s1 = inlined_call_operand.hbm [shape: f32[32,32], index: 1, kind: input, shape index: {}]
  %s2 = inlined_call_operand.vmem [shape: f32[1,32], index: 2, kind: input, shape index: {}]
  %s3 = inlined_call_operand.hbm [shape: f32[32,128], index: 3, kind: input, shape index: {}]
  %s4 = inlined_call_operand.vmem [shape: f32[1,128], index: 4, kind: input, shape index: {}]
  %s5 = inlined_call_operand.hbm [shape: f32[8,128], index: 5, kind: output, shape index: {}]
  %s6 = sld [smem:[#allocation0]]
  $region42: #{tpu_custom_call.1} parent=0
    _
  %s8 = ssub.s32 1, %s6
  %s9 = scalar_select 0, %s8, %s6
  $region1: #{tpu_custom_call.1} parent=0
    #allocation2 [shape = 'u8[4096]{0}', space=vmem, size = 0x1000, scoped, tag = 'input window, operand 0, single buffered']
    #allocation3 [shape = 's32[1]{0}', space=sflag, size = 0x4, scoped, tag = 'scoped memory for tpu_custom_call.1']
    #allocation4 [shape = 's32[1]{0}', space=sflag, size = 0x4, scoped, tag = 'scoped memory for tpu_custom_call.1']
    #allocation5 [shape = 'u8[16384]{0}', space=vmem, size = 0x4000, scoped, tag = 'input window, operand 1, single buffered']
    #allocation6 [shape = 's32[1]{0}', space=sflag, size = 0x4, scoped, tag = 'scoped memory for tpu_custom_call.1']
    #allocation7 [shape = 'u8[16384]{0}', space=vmem, size = 0x4000, scoped, tag = 'input window, operand 3, single buffered']
    #allocation8 [shape = 'u8[4096]{0}', space=vmem, size = 0x1000, scoped, tag = 'output window, operand 0, single buffered']
    %10 = vsyncpa [#allocation3], 0
    %11 = vsyncpa [#allocation6], 0
    %12 = vsyncpa [#allocation4], 0
    // Predicated region
    $region2: #{tpu_custom_call.1} parent=1 // pred_check
      _
    $region3: #{tpu_custom_call.1} parent=1 // pred_check_branch
      %14 = sbr.rel (0) target = $region5
    $region4: #{tpu_custom_call.1} parent=1 // pred_region
      %16 = vsyncadd [#allocation3], 0
      %s18 = sshll.u32 %s0, 4
      %s19 = int_to_ptr.hbm [resolvable:$true] %s18
      %s20 = sshll.u32 [#allocation2], 4
      %s21 = int_to_ptr.vmem [resolvable:$true] %s20
      %23 = dma.hbm_to_vmem [thread:$0]  %s19, 128, %s21, [#allocation3]
    $region5: #{tpu_custom_call.1} parent=1 // pred_fallthru
      _
    // Predicated region
    $region6: #{tpu_custom_call.1} parent=1 // pred_check
      _
    $region7: #{tpu_custom_call.1} parent=1 // pred_check_branch
      %25 = sbr.rel (0) target = $region9
    $region8: #{tpu_custom_call.1} parent=1 // pred_region
      %27 = vsyncadd [#allocation6], 0
      %s28 = sshll.u32 %s1, 4
      %s29 = int_to_ptr.hbm [resolvable:$true] %s28
      %s30 = sshll.u32 [#allocation5], 4
      %s31 = int_to_ptr.vmem [resolvable:$true] %s30
      %36 = dma.hbm_to_vmem [thread:$0]  %s29, 512, %s31, [#allocation6], 128, 128, 8
    $region9: #{tpu_custom_call.1} parent=1 // pred_fallthru
      _
    // Predicated region
    $region10: #{tpu_custom_call.1} parent=1 // pred_check
      _
    $region11: #{tpu_custom_call.1} parent=1 // pred_check_branch
      %38 = sbr.rel (0) target = $region13
    $region12: #{tpu_custom_call.1} parent=1 // pred_region
      _
    $region13: #{tpu_custom_call.1} parent=1 // pred_fallthru
      _
    // Predicated region
    $region14: #{tpu_custom_call.1} parent=1 // pred_check
      _
    $region15: #{tpu_custom_call.1} parent=1 // pred_check_branch
      %40 = sbr.rel (0) target = $region17
    $region16: #{tpu_custom_call.1} parent=1 // pred_region
      %42 = vsyncadd [#allocation6], 0
      %s43 = sshll.u32 %s3, 4
      %s44 = int_to_ptr.hbm [resolvable:$true] %s43
      %s45 = sshll.u32 [#allocation7], 4
      %s46 = int_to_ptr.vmem [resolvable:$true] %s45
      %51 = dma.hbm_to_vmem [thread:$0]  %s44, 512, %s46, [#allocation6], 128, 128, 8
    $region17: #{tpu_custom_call.1} parent=1 // pred_fallthru
      _
    // Predicated region
    $region18: #{tpu_custom_call.1} parent=1 // pred_check
      _
    $region19: #{tpu_custom_call.1} parent=1 // pred_check_branch
      %53 = sbr.rel (0) target = $region21
    $region20: #{tpu_custom_call.1} parent=1 // pred_region
      _
    $region21: #{tpu_custom_call.1} parent=1 // pred_fallthru
      _
    // Predicated region
    $region22: #{tpu_custom_call.1} parent=1 // pred_check
      _
    $region23: #{tpu_custom_call.1} parent=1 // pred_check_branch
      %55 = sbr.rel (0) target = $region25
    $region24: #{tpu_custom_call.1} parent=1 // pred_region
      %57 = dma.done [#allocation3], 128
    $region25: #{tpu_custom_call.1} parent=1 // pred_fallthru
      _
    // Predicated region
    $region26: #{tpu_custom_call.1} parent=1 // pred_check
      _
    $region27: #{tpu_custom_call.1} parent=1 // pred_check_branch
      %59 = sbr.rel (0) target = $region29
    $region28: #{tpu_custom_call.1} parent=1 // pred_region
      %61 = dma.done [#allocation6], 512
    $region29: #{tpu_custom_call.1} parent=1 // pred_fallthru
      _
    // Predicated region
    $region30: #{tpu_custom_call.1} parent=1 // pred_check
      _
    $region31: #{tpu_custom_call.1} parent=1 // pred_check_branch
      %63 = sbr.rel (0) target = $region33
    $region32: #{tpu_custom_call.1} parent=1 // pred_region
      %65 = dma.done [#allocation6], 512
    $region33: #{tpu_custom_call.1} parent=1 // pred_fallthru
      _
    %v66 = vld [vmem:[#allocation2] sm:$0xff]
    %v67 = vld [vmem:[#allocation5] sm:$0xff]
    %v68 = vld [vmem:[#allocation5 + $0x8] sm:$0xff]
    %v69 = vld [vmem:[#allocation5 + $0x10] sm:$0xff]
    %v70 = vld [vmem:[#allocation5 + $0x18] sm:$0xff]
    %v71 = vld [vmem:[%s2] sm:$0x1]
    %v73 = vperm.slane %v71, 0
    %vm75 = vcmask 261120
    %v77 = vsel %vm75, %v66, 0
    %79 = vmatpush.msra.mxu0 0.0
    %80 = vmatpush.msra.mxu0 0.0
    %81 = vmatpush.msra.mxu0 0.0
    %82 = vmatpush.msra.mxu0 0.0
    %83 = vmatpush.msra.mxu0 0.0
    %84 = vmatpush.msra.mxu0 0.0
    %85 = vmatpush.msra.mxu0 0.0
    %86 = vmatpush.msra.mxu0 0.0
    %87 = vmatpush.msra.mxu0 0.0
    %88 = vmatpush.msra.mxu0 0.0
    %89 = vmatpush.msra.mxu0 0.0
    %90 = vmatpush.msra.mxu0 0.0
    %91 = vmatpush.msra.mxu0 %v70
    %92 = vmatpush.msra.mxu0 %v69
    %93 = vmatpush.msra.mxu0 %v68
    %94 = vmatpush.msra.mxu0 %v67
    %95 = vmatmul.f32.gmra.mxu0 %v77
    %v96 = vpop.f32.mrf.mxu0
    %v97 = vadd.f32 %v73, %v96
    %98 = vdwg.mxu0
    %v99 = vmax.f32 %v97, 0.0
    %v100 = vld [vmem:[#allocation7] sm:$0xff]
    %v101 = vld [vmem:[#allocation7 + $0x8] sm:$0xff]
    %v102 = vld [vmem:[#allocation7 + $0x10] sm:$0xff]
    %v103 = vld [vmem:[#allocation7 + $0x18] sm:$0xff]
    %v104 = vld [vmem:[%s4] sm:$0x1]
    %v106 = vperm.slane %v104, 0
    %v109 = vsel %vm75, %v99, 0
    %111 = vmatpush.msra.mxu0 0.0
    %112 = vmatpush.msra.mxu0 0.0
    %113 = vmatpush.msra.mxu0 0.0
    %114 = vmatpush.msra.mxu0 0.0
    %115 = vmatpush.msra.mxu0 0.0
    %116 = vmatpush.msra.mxu0 0.0
    %117 = vmatpush.msra.mxu0 0.0
    %118 = vmatpush.msra.mxu0 0.0
    %119 = vmatpush.msra.mxu0 0.0
    %120 = vmatpush.msra.mxu0 0.0
    %121 = vmatpush.msra.mxu0 0.0
    %122 = vmatpush.msra.mxu0 0.0
    %123 = vmatpush.msra.mxu0 %v103
    %124 = vmatpush.msra.mxu0 %v102
    %125 = vmatpush.msra.mxu0 %v101
    %126 = vmatpush.msra.mxu0 %v100
    %127 = vmatmul.f32.gmra.mxu0 %v109
    %v128 = vpop.f32.mrf.mxu0
    %v129 = vadd.f32 %v106, %v128
    %130 = vdwg.mxu0
    %131 = vst [vmem:[#allocation8] sm:$0xff] %v129
    // Predicated region
    $region34: #{tpu_custom_call.1} parent=1 // pred_check
      _
    $region35: #{tpu_custom_call.1} parent=1 // pred_check_branch
      %133 = sbr.rel (0) target = $region37
    $region36: #{tpu_custom_call.1} parent=1 // pred_region
      %135 = vsyncadd [#allocation4], 0
      %s137 = sshll.u32 [#allocation8], 4
      %s138 = int_to_ptr.vmem [resolvable:$true] %s137
      %s139 = sshll.u32 %s5, 4
      %s140 = int_to_ptr.hbm [resolvable:$true] %s139
      %142 = dma.vmem_to_hbm [thread:$0]  %s138, 128, %s140, [#allocation4]
    $region37: #{tpu_custom_call.1} parent=1 // pred_fallthru
      _
    // Predicated region
    $region38: #{tpu_custom_call.1} parent=1 // pred_check
      _
    $region39: #{tpu_custom_call.1} parent=1 // pred_check_branch
      %144 = sbr.rel (0) target = $region41
    $region40: #{tpu_custom_call.1} parent=1 // pred_region
      %146 = dma.done [#allocation4], 128
    $region41: #{tpu_custom_call.1} parent=1 // pred_fallthru
      _
    %147 = vsyncpa [#allocation3], 1
    %148 = vsyncpa [#allocation6], 1
    %149 = vsyncpa [#allocation4], 1

</llo_original>
